<compile_context>
chip_gen: v7x
topology: tpu7x:2x2x1
jax: 0.10.0
libtpu: 0.0.40
codegen_flags: <defaults>
</compile_context>

<pallas_src>
import numpy as np
import jax
import jax.numpy as jnp
from jax.experimental import pallas as pl
from jax.experimental.pallas import tpu as pltpu

FEATURE_DIM = 22
EMB_SIZE = 64
F_PAD = 24            # feature rows padded to a multiple of 8; row 22 = ones (bias fold), row 23 = 0

# Packed-slab row layout (lane width = EMB_SIZE = 64):
#   rows [  0: 64)  W1 as (out, in): lanes [0:22) weight, lane 22 = b1 (folded), lanes 23.. = 0
#   rows [ 64:128)  W2 as (out, in)
#   rows [128:192)  b2 stored as a column at lane 0
#   row   192       w3 stored as a row
#   row   193       b3 at lane 0
_R_W2 = EMB_SIZE                 # 64
_R_B2 = 2 * EMB_SIZE             # 128
_R_W3 = 3 * EMB_SIZE             # 192
_R_B3 = 3 * EMB_SIZE + 1         # 193
SLAB_ROWS = 3 * EMB_SIZE + 8     # 200


def _feature_mlp_kernel(x_ref, slab_ref, out_ref):
    x = x_ref[...]                                    # (24, TILE_B); row 22 == 1.0, row 23 == 0.0

    w1 = slab_ref[0:EMB_SIZE, 0:F_PAD]                # (64, 24)  (out, in + folded bias)
    w2 = slab_ref[_R_W2:_R_W2 + EMB_SIZE, :]          # (64, 64)  (out, in)
    b2 = slab_ref[_R_B2:_R_B2 + EMB_SIZE, 0:1]        # (64, 1)
    w3 = slab_ref[_R_W3:_R_W3 + 1, :]                 # (1, 64)
    b3 = slab_ref[_R_B3:_R_B3 + 1, 0:1]               # (1, 1)

    # Layer 1: Linear(22->64) + ReLU  (b1 folded into W1 via the ones row of x)
    h1 = jnp.maximum(jnp.dot(w1, x, preferred_element_type=jnp.float32), 0.0)       # (64, T)
    # Layer 2: Linear(64->64) + ReLU
    h2 = jnp.maximum(jnp.dot(w2, h1, preferred_element_type=jnp.float32) + b2, 0.0)  # (64, T)
    # Layer 3: Linear(64->1) -> lane-dense (1, TILE_B) output row
    out = jnp.dot(w3, h2, preferred_element_type=jnp.float32) + b3                   # (1, T)
    out_ref[...] = out.astype(out_ref.dtype)


def _pack_params(p):
    """Pack all weights/biases into one (200, 64) f32 slab (single resident DMA)."""
    f32 = jnp.float32
    w1_blk = jnp.zeros((EMB_SIZE, EMB_SIZE), f32)
    w1_blk = w1_blk.at[:, :FEATURE_DIM].set(p["w1"].astype(f32))      # (64, 22) torch (out, in)
    w1_blk = w1_blk.at[:, FEATURE_DIM].set(p["b1"].astype(f32))       # fold b1 (x row 22 == 1.0)
    w2_blk = p["w2"].astype(f32)                                      # (64, 64) torch (out, in)
    b2_blk = jnp.zeros((EMB_SIZE, EMB_SIZE), f32).at[:, 0].set(p["b2"].astype(f32))
    tail = jnp.zeros((8, EMB_SIZE), f32)
    tail = tail.at[0, :].set(p["w3"].astype(f32)[0, :])               # w3 row
    tail = tail.at[1, 0].set(p["b3"].astype(f32)[0])                  # b3
    return jnp.concatenate([w1_blk, w2_blk, b2_blk, tail], axis=0)    # (200, 64)


def _round_up(x, m):
    return (x + m - 1) // m * m


def feature_mlp_forward(features, params, *, max_tile_b=8192):
    """features: (B, 22) float -> (B, 1) float32."""
    B, F = features.shape
    assert F == FEATURE_DIM
    assert max_tile_b % 128 == 0

    tile_b = min(max_tile_b, _round_up(B, 128))
    b_pad = _round_up(B, tile_b)
    grid = (b_pad // tile_b,)

    # Batch-on-lanes: x transposed to (24, B_pad); row 22 = 1.0 (bias fold), row 23 = 0.
    x_t = jnp.zeros((F_PAD, b_pad), jnp.float32)
    x_t = x_t.at[:FEATURE_DIM, :B].set(features.astype(jnp.float32).T)
    x_t = x_t.at[FEATURE_DIM, :].set(1.0)

    slab = _pack_params(params)
    assert slab.shape == (SLAB_ROWS, EMB_SIZE)

    out = pl.pallas_call(
        _feature_mlp_kernel,
        out_shape=jax.ShapeDtypeStruct((1, b_pad), jnp.float32),
        grid=grid,
        in_specs=[
            pl.BlockSpec((F_PAD, tile_b), lambda i: (0, i)),            # lane-dense batch tiles
            pl.BlockSpec((SLAB_ROWS, EMB_SIZE), lambda i: (0, 0)),      # params resident, one DMA
        ],
        out_specs=pl.BlockSpec((1, tile_b), lambda i: (0, i)),          # lane-dense output row
        compiler_params=pltpu.CompilerParams(
            dimension_semantics=("parallel",)),                         # 2x on v7x dual-TC
    )(x_t, slab)

    return out[0, :B][:, None]                                          # (B, 1)


# ----------------------------- reference (plain JAX) -----------------------------
def reference_forward(features, p):
    x = features.astype(jnp.float32)
    h1 = jnp.maximum(x @ p["w1"].T + p["b1"], 0.0)
    h2 = jnp.maximum(h1 @ p["w2"].T + p["b2"], 0.0)
    return h2 @ p["w3"].T + p["b3"]


# ----------------------------- parameter construction -----------------------------
def _xavier(key, shape):
    limit = float(np.sqrt(6.0 / (shape[0] + shape[1])))
    return jax.random.uniform(key, shape, jnp.float32, -limit, limit)


def init_params(key, random_bias=False):
    # Weights in torch layout (out, in). torch init zeros the biases; the
    # random_bias option is used in the test to actually exercise the bias paths.
    k1, k2, k3, kb1, kb2, kb3 = jax.random.split(key, 6)
    if random_bias:
        b1 = 0.1 * jax.random.normal(kb1, (EMB_SIZE,), jnp.float32)
        b2 = 0.1 * jax.random.normal(kb2, (EMB_SIZE,), jnp.float32)
        b3 = 0.1 * jax.random.normal(kb3, (1,), jnp.float32)
    else:
        b1 = jnp.zeros((EMB_SIZE,), jnp.float32)
        b2 = jnp.zeros((EMB_SIZE,), jnp.float32)
        b3 = jnp.zeros((1,), jnp.float32)
    return {
        "w1": _xavier(k1, (EMB_SIZE, FEATURE_DIM)),
        "b1": b1,
        "w2": _xavier(k2, (EMB_SIZE, EMB_SIZE)),
        "b2": b2,
        "w3": _xavier(k3, (1, EMB_SIZE)),
        "b3": b3,
    }


if __name__ == "__main__":
    key = jax.random.PRNGKey(0)
    k_feat, k_feat2, k_par = jax.random.split(key, 3)

    params = init_params(k_par, random_bias=True)

    # Small shape consistent with the module: batch=2, feature_dim=22 (single tile).
    feats_small = jax.random.normal(k_feat, (2, FEATURE_DIM), jnp.float32)
    out_small = jax.block_until_ready(feature_mlp_forward(feats_small, params))
    ref_small = jax.block_until_ready(reference_forward(feats_small, params))
    assert out_small.shape == (2, 1)
    np.testing.assert_allclose(np.asarray(out_small), np.asarray(ref_small),
                               rtol=1e-5, atol=1e-5)

    # Multi-tile path: small max_tile_b forces a 3-step grid with a padded tail.
    feats_big = jax.random.normal(k_feat2, (300, FEATURE_DIM), jnp.float32)
    out_big = jax.block_until_ready(
        feature_mlp_forward(feats_big, params, max_tile_b=128))
    ref_big = jax.block_until_ready(reference_forward(feats_big, params))
    assert out_big.shape == (300, 1)
    np.testing.assert_allclose(np.asarray(out_big), np.asarray(ref_big),
                               rtol=1e-5, atol=1e-5)

    print("KERNEL_OK")
</pallas_src>

<mosaic_0001>
module attributes {stable_mosaic.version = 11 : i64} {
  func.func @_feature_mlp_kernel(%arg0: i32, %arg1: memref<24x128xf32, #tpu.memory_space<vmem>>, %arg2: memref<200x64xf32, #tpu.memory_space<vmem>>, %arg3: memref<1x128xf32, #tpu.memory_space<vmem>>) attributes {dimension_semantics = [#tpu.dimension_semantics<parallel>], iteration_bounds = array<i64: 1>, scalar_prefetch = 0 : i64, scratch_operands = 0 : i64, tpu.core_type = #tpu.core_type<tc>, window_params = [{transform_indices = @transform_0, window_bounds = array<i64: 24, 128>}, {pipeline_mode = #tpu.pipeline_mode<synchronous>, transform_indices = @transform_1, window_bounds = array<i64: 200, 64>}, {transform_indices = @transform_2, window_bounds = array<i64: 1, 128>}]} {
    %c0 = arith.constant 0 : index
    %c0_0 = arith.constant 0 : index
    %0 = vector.load %arg1[%c0, %c0_0] : memref<24x128xf32, #tpu.memory_space<vmem>>, vector<24x128xf32>
    %c0_1 = arith.constant 0 : index
    %c0_2 = arith.constant 0 : index
    %1 = vector.load %arg2[%c0_1, %c0_2] : memref<200x64xf32, #tpu.memory_space<vmem>>, vector<64x24xf32>
    %c64 = arith.constant 64 : index
    %c0_3 = arith.constant 0 : index
    %2 = vector.load %arg2[%c64, %c0_3] : memref<200x64xf32, #tpu.memory_space<vmem>>, vector<64x64xf32>
    %c128 = arith.constant 128 : index
    %c0_4 = arith.constant 0 : index
    %3 = vector.load %arg2[%c128, %c0_4] : memref<200x64xf32, #tpu.memory_space<vmem>>, vector<64x1xf32>
    %c192 = arith.constant 192 : index
    %c0_5 = arith.constant 0 : index
    %4 = vector.load %arg2[%c192, %c0_5] : memref<200x64xf32, #tpu.memory_space<vmem>>, vector<1x64xf32>
    %c193 = arith.constant 193 : index
    %c0_6 = arith.constant 0 : index
    %5 = vector.load %arg2[%c193, %c0_6] : memref<200x64xf32, #tpu.memory_space<vmem>>, vector<1x1xf32>
    %cst = arith.constant dense<0.000000e+00> : vector<64x128xf32>
    %6 = tpu.matmul %1, %0, %cst {dimension_numbers = #tpu.dot_dimension_numbers<[1], [0], [0], [1], [0, 0, 1, 1], [], []>} : vector<64x24xf32>, vector<24x128xf32>, vector<64x128xf32> -> vector<64x128xf32>
    %cst_7 = arith.constant 0.000000e+00 : f32
    %7 = vector.broadcast %cst_7 : f32 to vector<64x128xf32>
    %8 = arith.maximumf %6, %7 : vector<64x128xf32>
    %cst_8 = arith.constant dense<0.000000e+00> : vector<64x128xf32>
    %9 = tpu.matmul %2, %8, %cst_8 {dimension_numbers = #tpu.dot_dimension_numbers<[1], [0], [0], [1], [0, 0, 1, 1], [], []>} : vector<64x64xf32>, vector<64x128xf32>, vector<64x128xf32> -> vector<64x128xf32>
    %10 = vector.broadcast %3 : vector<64x1xf32> to vector<64x128xf32>
    %11 = arith.addf %9, %10 : vector<64x128xf32>
    %cst_9 = arith.constant 0.000000e+00 : f32
    %12 = vector.broadcast %cst_9 : f32 to vector<64x128xf32>
    %13 = arith.maximumf %11, %12 : vector<64x128xf32>
    %cst_10 = arith.constant dense<0.000000e+00> : vector<1x128xf32>
    %14 = tpu.matmul %4, %13, %cst_10 {dimension_numbers = #tpu.dot_dimension_numbers<[1], [0], [0], [1], [0, 0, 1, 1], [], []>} : vector<1x64xf32>, vector<64x128xf32>, vector<1x128xf32> -> vector<1x128xf32>
    %15 = vector.broadcast %5 : vector<1x1xf32> to vector<1x128xf32>
    %16 = arith.addf %14, %15 : vector<1x128xf32>
    %c0_11 = arith.constant 0 : index
    %c0_12 = arith.constant 0 : index
    %17 = vector.load %arg3[%c0_11, %c0_12] : memref<1x128xf32, #tpu.memory_space<vmem>>, vector<1x128xf32>
    tpu.vector_store %arg3[%c0_11, %c0_12], %16 {strides = array<i32>} : memref<1x128xf32, #tpu.memory_space<vmem>>, vector<1x128xf32>,
    return
  }
  func.func @transform_0(%arg0: i32) -> (i32, i32) {
    %c0_i32 = arith.constant 0 : i32
    %c0_i32_0 = arith.constant 0 : i32
    return %c0_i32, %arg0 : i32, i32
  }
  func.func @transform_1(%arg0: i32) -> (i32, i32) {
    %c0_i32 = arith.constant 0 : i32
    %c0_i32_0 = arith.constant 0 : i32
    %c0_i32_1 = arith.constant 0 : i32
    return %c0_i32, %c0_i32_0 : i32, i32
  }
  func.func @transform_2(%arg0: i32) -> (i32, i32) {
    %c0_i32 = arith.constant 0 : i32
    %c0_i32_0 = arith.constant 0 : i32
    return %c0_i32, %arg0 : i32, i32
  }
}

</mosaic_0001>

<llo_original>
// kernel: tpu_custom_call.1
$region0: #{tpu_custom_call.1}
  #allocation0 [shape = 'u32[]', space=smem, size = 0x4, offset = 0x4, fixed_abs, tag = 'smem constant byte address 0x4 - core index']
  #allocation1 [shape = 'u32[144,128]{1,0:T(1,128)}', space=vmem, size = 0x12000, scoped, tag = 'internal scratch']
  %s0 = inlined_call_operand.vmem [shape: f32[24,128], index: 0, kind: input, shape index: {}]
  %s1 = inlined_call_operand.vmem [shape: f32[200,64], index: 1, kind: input, shape index: {}]
  %s2 = inlined_call_operand.hbm [shape: f32[1,128], index: 2, kind: output, shape index: {}]
  %s3 = sld [smem:[#allocation0]]
  $region18: #{tpu_custom_call.1} parent=0
    _
  %s5 = ssub.s32 1, %s3
  %s6 = scalar_select 0, %s5, %s3
  $region1: #{tpu_custom_call.1} parent=0
    #allocation2 [shape = 'u8[512]{0}', space=vmem, size = 0x400, scoped, tag = 'output window, operand 0, single buffered']
    #allocation3 [shape = 's32[1]{0}', space=sflag, size = 0x4, scoped, tag = 'scoped memory for tpu_custom_call.1']
    %7 = vsyncpa [#allocation3], 0
    // Predicated region
    $region2: #{tpu_custom_call.1} parent=1 // pred_check
      _
    $region3: #{tpu_custom_call.1} parent=1 // pred_check_branch
      %9 = sbr.rel (0) target = $region5
    $region4: #{tpu_custom_call.1} parent=1 // pred_region
      _
    $region5: #{tpu_custom_call.1} parent=1 // pred_fallthru
      _
    // Predicated region
    $region6: #{tpu_custom_call.1} parent=1 // pred_check
      _
    $region7: #{tpu_custom_call.1} parent=1 // pred_check_branch
      %11 = sbr.rel (0) target = $region9
    $region8: #{tpu_custom_call.1} parent=1 // pred_region
      _
    $region9: #{tpu_custom_call.1} parent=1 // pred_fallthru
      _
    %v12 = vld [vmem:[%s0] sm:$0xff]
    %v13 = vld [vmem:[%s0 + $0x8] sm:$0xff]
    %v14 = vld [vmem:[%s0 + $0x10] sm:$0xff]
    %v15 = vld [vmem:[%s1] sm:$0xff]
    %v16 = vld [vmem:[%s1 + $0x8] sm:$0xff]
    %v17 = vld [vmem:[%s1 + $0x10] sm:$0xff]
    %v18 = vld [vmem:[%s1 + $0x18] sm:$0xff]
    %v19 = vld [vmem:[%s1 + $0x20] sm:$0xff]
    %v20 = vld [vmem:[%s1 + $0x28] sm:$0xff]
    %v21 = vld [vmem:[%s1 + $0x30] sm:$0xff]
    %v22 = vld [vmem:[%s1 + $0x38] sm:$0xff]
    %v23 = vld [vmem:[%s1 + $0x40] sm:$0xff]
    %v24 = vld [vmem:[%s1 + $0x48] sm:$0xff]
    %v25 = vld [vmem:[%s1 + $0x50] sm:$0xff]
    %v26 = vld [vmem:[%s1 + $0x58] sm:$0xff]
    %v27 = vld [vmem:[%s1 + $0x60] sm:$0xff]
    %v28 = vld [vmem:[%s1 + $0x68] sm:$0xff]
    %v29 = vld [vmem:[%s1 + $0x70] sm:$0xff]
    %v30 = vld [vmem:[%s1 + $0x78] sm:$0xff]
    %v31 = vld [vmem:[%s1 + $0x80] sm:$0xff]
    %v32 = vld [vmem:[%s1 + $0x88] sm:$0xff]
    %v33 = vld [vmem:[%s1 + $0x90] sm:$0xff]
    %v34 = vld [vmem:[%s1 + $0x98] sm:$0xff]
    %v35 = vld [vmem:[%s1 + $0xa0] sm:$0xff]
    %v36 = vld [vmem:[%s1 + $0xa8] sm:$0xff]
    %v37 = vld [vmem:[%s1 + $0xb0] sm:$0xff]
    %v38 = vld [vmem:[%s1 + $0xb8] sm:$0xff]
    %v39 = vld [vmem:[%s1 + $0xc0] sm:$0x1]
    %v40 = vld [vmem:[%s1 + $0xc1] sm:$0x1]
    %vm41 = vcmask 195584
    %v43 = vsel %vm41, %v15, 0
    %v46 = vsel %vm41, %v16, 0
    %v49 = vsel %vm41, %v17, 0
    %v52 = vsel %vm41, %v18, 0
    %v55 = vsel %vm41, %v19, 0
    %v58 = vsel %vm41, %v20, 0
    %v61 = vsel %vm41, %v21, 0
    %v64 = vsel %vm41, %v22, 0
    %66 = vmatprep.subr.mxu0 0.0
    %67 = vmatpush1.msra.mxu0 %v12
    %68 = vmatprep.subr.mxu0 0.0
    %69 = vmatpush1.msra.mxu0 %v13
    %70 = vmatprep.subr.mxu0 0.0
    %71 = vmatpush1.msra.mxu0 %v14
    %72 = vmatprep.subr.mxu0 0.0
    %73 = vmatpush1.msra.mxu0 0.0
    %74 = vmatprep.subr.mxu0 0.0
    %75 = vmatpush1.msra.mxu0 0.0
    %76 = vmatprep.subr.mxu0 0.0
    %77 = vmatpush1.msra.mxu0 0.0
    %78 = vmatprep.subr.mxu0 0.0
    %79 = vmatpush1.msra.mxu0 0.0
    %80 = vmatprep.subr.mxu0 0.0
    %81 = vmatpush1.msra.mxu0 0.0
    %82 = vmatprep.subr.mxu0 0.0
    %83 = vmatpush1.msra.mxu0 0.0
    %84 = vmatprep.subr.mxu0 0.0
    %85 = vmatpush1.msra.mxu0 0.0
    %86 = vmatprep.subr.mxu0 0.0
    %87 = vmatpush1.msra.mxu0 0.0
    %88 = vmatprep.subr.mxu0 0.0
    %89 = vmatpush1.msra.mxu0 0.0
    %90 = vmatprep.subr.mxu0 0.0
    %91 = vmatpush1.msra.mxu0 0.0
    %92 = vmatprep.subr.mxu0 0.0
    %93 = vmatpush1.msra.mxu0 0.0
    %94 = vmatprep.subr.mxu0 0.0
    %95 = vmatpush1.msra.mxu0 0.0
    %96 = vmatprep.subr.mxu0 0.0
    %97 = vmatpush1.msra.mxu0 0.0
    %98 = vmatprep.subr.mxu0 0.0
    %99 = vmatpush1.msra.mxu0 0.0
    %100 = vmatprep.subr.mxu0 0.0
    %101 = vmatpush1.msra.mxu0 0.0
    %102 = vmatprep.subr.mxu0 0.0
    %103 = vmatpush1.msra.mxu0 0.0
    %104 = vmatprep.subr.mxu0 0.0
    %105 = vmatpush1.msra.mxu0 0.0
    %106 = vmatprep.subr.mxu0 0.0
    %107 = vmatpush1.msra.mxu0 0.0
    %108 = vmatprep.subr.mxu0 0.0
    %109 = vmatpush1.msra.mxu0 0.0
    %110 = vmatprep.subr.mxu0 0.0
    %111 = vmatpush1.msra.mxu0 0.0
    %112 = vmatprep.subr.mxu0 0.0
    %113 = vmatpush1.msra.mxu0 0.0
    %114 = vmatprep.subr.mxu0 0.0
    %115 = vmatpush1.msra.mxu0 0.0
    %116 = vmatprep.subr.mxu0 0.0
    %117 = vmatpush1.msra.mxu0 0.0
    %118 = vmatprep.subr.mxu0 0.0
    %119 = vmatpush1.msra.mxu0 0.0
    %120 = vmatprep.subr.mxu0 0.0
    %121 = vmatpush1.msra.mxu0 0.0
    %122 = vmatprep.subr.mxu0 0.0
    %123 = vmatpush1.msra.mxu0 0.0
    %124 = vmatprep.subr.mxu0 0.0
    %125 = vmatpush1.msra.mxu0 0.0
    %126 = vmatprep.subr.mxu0 0.0
    %127 = vmatpush1.msra.mxu0 0.0
    %128 = vmatprep.subr.mxu0 0.0
    %129 = vmatpush1.msra.mxu0 0.0
    %130 = vmatprep.mubr.f32.mxu0 0.0
    %131 = vmatmul.mubr.f32.gmra.mrb[0].mxu0 %v43
    %v132 = vpop.f32.mrb[0].mxu0
    %v133 = vadd.f32 0.0, %v132
    %v134 = vpop.f32.mrb[0].mxu0
    %135 = vmatprep.mubr.f32.mxu0 0.0
    %136 = vmatmul.mubr.f32.gmra.mrb[0].mxu0 %v46
    %v137 = vpop.f32.mrb[0].mxu0
    %v138 = vadd.f32 0.0, %v137
    %v139 = vpop.f32.mrb[0].mxu0
    %140 = vmatprep.mubr.f32.mxu0 0.0
    %141 = vmatmul.mubr.f32.gmra.mrb[0].mxu0 %v49
    %v142 = vpop.f32.mrb[0].mxu0
    %v143 = vadd.f32 0.0, %v142
    %v144 = vpop.f32.mrb[0].mxu0
    %145 = vmatprep.mubr.f32.mxu0 0.0
    %146 = vmatmul.mubr.f32.gmra.mrb[0].mxu0 %v52
    %v147 = vpop.f32.mrb[0].mxu0
    %v148 = vadd.f32 0.0, %v147
    %v149 = vpop.f32.mrb[0].mxu0
    %150 = vmatprep.mubr.f32.mxu0 0.0
    %151 = vmatmul.mubr.f32.gmra.mrb[0].mxu0 %v55
    %v152 = vpop.f32.mrb[0].mxu0
    %v153 = vadd.f32 0.0, %v152
    %v154 = vpop.f32.mrb[0].mxu0
    %155 = vmatprep.mubr.f32.mxu0 0.0
    %156 = vmatmul.mubr.f32.gmra.mrb[0].mxu0 %v58
    %v157 = vpop.f32.mrb[0].mxu0
    %v158 = vadd.f32 0.0, %v157
    %v159 = vpop.f32.mrb[0].mxu0
    %160 = vmatprep.mubr.f32.mxu0 0.0
    %161 = vmatmul.mubr.f32.gmra.mrb[0].mxu0 %v61
    %v162 = vpop.f32.mrb[0].mxu0
    %v163 = vadd.f32 0.0, %v162
    %v164 = vpop.f32.mrb[0].mxu0
    %165 = vmatprep.mubr.f32.mxu0 0.0
    %166 = vmatmul.mubr.f32.gmra.mrb[0].mxu0 %v64
    %v167 = vpop.f32.mrb[0].mxu0
    %v168 = vadd.f32 0.0, %v167
    %v169 = vpop.f32.mrb[0].mxu0
    %170 = vdwg.mxu0
    %v171 = vmax.f32 %v133, 0.0
    %v172 = vmax.f32 %v138, 0.0
    %v173 = vmax.f32 %v143, 0.0
    %v174 = vmax.f32 %v148, 0.0
    %v175 = vmax.f32 %v153, 0.0
    %v176 = vmax.f32 %v158, 0.0
    %v177 = vmax.f32 %v163, 0.0
    %v178 = vmax.f32 %v168, 0.0
    %180 = vset.pattern.permute.xlu0 0
    %181 = vperm.xlu0 %180, %v31
    %v182 = vpop.permute.xlu0 %181
    %185 = vset.pattern.permute.xlu0 0
    %186 = vperm.xlu0 %185, %v32
    %v187 = vpop.permute.xlu0 %186
    %190 = vset.pattern.permute.xlu0 0
    %191 = vperm.xlu0 %190, %v33
    %v192 = vpop.permute.xlu0 %191
    %195 = vset.pattern.permute.xlu0 0
    %196 = vperm.xlu0 %195, %v34
    %v197 = vpop.permute.xlu0 %196
    %200 = vset.pattern.permute.xlu0 0
    %201 = vperm.xlu0 %200, %v35
    %v202 = vpop.permute.xlu0 %201
    %205 = vset.pattern.permute.xlu0 0
    %206 = vperm.xlu0 %205, %v36
    %v207 = vpop.permute.xlu0 %206
    %210 = vset.pattern.permute.xlu0 0
    %211 = vperm.xlu0 %210, %v37
    %v212 = vpop.permute.xlu0 %211
    %215 = vset.pattern.permute.xlu0 0
    %216 = vperm.xlu0 %215, %v38
    %v217 = vpop.permute.xlu0 %216
    %vm219 = vcmask 523264
    %v221 = vsel %vm219, %v23, 0
    %v224 = vsel %vm219, %v24, 0
    %v227 = vsel %vm219, %v25, 0
    %v230 = vsel %vm219, %v26, 0
    %v233 = vsel %vm219, %v27, 0
    %v236 = vsel %vm219, %v28, 0
    %v239 = vsel %vm219, %v29, 0
    %v242 = vsel %vm219, %v30, 0
    %244 = vmatprep.subr.mxu0 0.0
    %245 = vmatpush1.msra.mxu0 %v171
    %246 = vmatprep.subr.mxu0 0.0
    %247 = vmatpush1.msra.mxu0 %v172
    %248 = vmatprep.subr.mxu0 0.0
    %249 = vmatpush1.msra.mxu0 %v173
    %250 = vmatprep.subr.mxu0 0.0
    %251 = vmatpush1.msra.mxu0 %v174
    %252 = vmatprep.subr.mxu0 0.0
    %253 = vmatpush1.msra.mxu0 %v175
    %254 = vmatprep.subr.mxu0 0.0
    %255 = vmatpush1.msra.mxu0 %v176
    %256 = vmatprep.subr.mxu0 0.0
    %257 = vmatpush1.msra.mxu0 %v177
    %258 = vmatprep.subr.mxu0 0.0
    %259 = vmatpush1.msra.mxu0 %v178
    %260 = vmatprep.subr.mxu0 0.0
    %261 = vmatpush1.msra.mxu0 0.0
    %262 = vmatprep.subr.mxu0 0.0
    %263 = vmatpush1.msra.mxu0 0.0
    %264 = vmatprep.subr.mxu0 0.0
    %265 = vmatpush1.msra.mxu0 0.0
    %266 = vmatprep.subr.mxu0 0.0
    %267 = vmatpush1.msra.mxu0 0.0
    %268 = vmatprep.subr.mxu0 0.0
    %269 = vmatpush1.msra.mxu0 0.0
    %270 = vmatprep.subr.mxu0 0.0
    %271 = vmatpush1.msra.mxu0 0.0
    %272 = vmatprep.subr.mxu0 0.0
    %273 = vmatpush1.msra.mxu0 0.0
    %274 = vmatprep.subr.mxu0 0.0
    %275 = vmatpush1.msra.mxu0 0.0
    %276 = vmatprep.subr.mxu0 0.0
    %277 = vmatpush1.msra.mxu0 0.0
    %278 = vmatprep.subr.mxu0 0.0
    %279 = vmatpush1.msra.mxu0 0.0
    %280 = vmatprep.subr.mxu0 0.0
    %281 = vmatpush1.msra.mxu0 0.0
    %282 = vmatprep.subr.mxu0 0.0
    %283 = vmatpush1.msra.mxu0 0.0
    %284 = vmatprep.subr.mxu0 0.0
    %285 = vmatpush1.msra.mxu0 0.0
    %286 = vmatprep.subr.mxu0 0.0
    %287 = vmatpush1.msra.mxu0 0.0
    %288 = vmatprep.subr.mxu0 0.0
    %289 = vmatpush1.msra.mxu0 0.0
    %290 = vmatprep.subr.mxu0 0.0
    %291 = vmatpush1.msra.mxu0 0.0
    %292 = vmatprep.subr.mxu0 0.0
    %293 = vmatpush1.msra.mxu0 0.0
    %294 = vmatprep.subr.mxu0 0.0
    %295 = vmatpush1.msra.mxu0 0.0
    %296 = vmatprep.subr.mxu0 0.0
    %297 = vmatpush1.msra.mxu0 0.0
    %298 = vmatprep.subr.mxu0 0.0
    %299 = vmatpush1.msra.mxu0 0.0
    %300 = vmatprep.subr.mxu0 0.0
    %301 = vmatpush1.msra.mxu0 0.0
    %302 = vmatprep.subr.mxu0 0.0
    %303 = vmatpush1.msra.mxu0 0.0
    %304 = vmatprep.subr.mxu0 0.0
    %305 = vmatpush1.msra.mxu0 0.0
    %306 = vmatprep.subr.mxu0 0.0
    %307 = vmatpush1.msra.mxu0 0.0
    %308 = vmatprep.mubr.f32.mxu0 0.0
    %309 = vmatmul.mubr.f32.gmra.mrb[0].mxu0 %v221
    %v310 = vpop.f32.mrb[0].mxu0
    %v311 = vadd.f32 %v182, %v310
    %v312 = vpop.f32.mrb[0].mxu0
    %313 = vmatprep.mubr.f32.mxu0 0.0
    %314 = vmatmul.mubr.f32.gmra.mrb[0].mxu0 %v224
    %v315 = vpop.f32.mrb[0].mxu0
    %v316 = vadd.f32 %v187, %v315
    %v317 = vpop.f32.mrb[0].mxu0
    %318 = vmatprep.mubr.f32.mxu0 0.0
    %319 = vmatmul.mubr.f32.gmra.mrb[0].mxu0 %v227
    %v320 = vpop.f32.mrb[0].mxu0
    %v321 = vadd.f32 %v192, %v320
    %v322 = vpop.f32.mrb[0].mxu0
    %323 = vmatprep.mubr.f32.mxu0 0.0
    %324 = vmatmul.mubr.f32.gmra.mrb[0].mxu0 %v230
    %v325 = vpop.f32.mrb[0].mxu0
    %v326 = vadd.f32 %v197, %v325
    %v327 = vpop.f32.mrb[0].mxu0
    %328 = vmatprep.mubr.f32.mxu0 0.0
    %329 = vmatmul.mubr.f32.gmra.mrb[0].mxu0 %v233
    %v330 = vpop.f32.mrb[0].mxu0
    %v331 = vadd.f32 %v202, %v330
    %v332 = vpop.f32.mrb[0].mxu0
    %333 = vmatprep.mubr.f32.mxu0 0.0
    %334 = vmatmul.mubr.f32.gmra.mrb[0].mxu0 %v236
    %v335 = vpop.f32.mrb[0].mxu0
    %v336 = vadd.f32 %v207, %v335
    %v337 = vpop.f32.mrb[0].mxu0
    %338 = vmatprep.mubr.f32.mxu0 0.0
    %339 = vmatmul.mubr.f32.gmra.mrb[0].mxu0 %v239
    %v340 = vpop.f32.mrb[0].mxu0
    %v341 = vadd.f32 %v212, %v340
    %v342 = vpop.f32.mrb[0].mxu0
    %343 = vmatprep.mubr.f32.mxu0 0.0
    %344 = vmatmul.mubr.f32.gmra.mrb[0].mxu0 %v242
    %v345 = vpop.f32.mrb[0].mxu0
    %v346 = vadd.f32 %v217, %v345
    %v347 = vpop.f32.mrb[0].mxu0
    %348 = vdwg.mxu0
    %v349 = vmax.f32 %v311, 0.0
    %v350 = vmax.f32 %v316, 0.0
    %v351 = vmax.f32 %v321, 0.0
    %v352 = vmax.f32 %v326, 0.0
    %v353 = vmax.f32 %v331, 0.0
    %v354 = vmax.f32 %v336, 0.0
    %v355 = vmax.f32 %v341, 0.0
    %v356 = vmax.f32 %v346, 0.0
    %358 = vset.pattern.permute.xlu0 0
    %359 = vperm.xlu0 %358, %v40
    %v360 = vpop.permute.xlu0 %359
    %v363 = vsel %vm219, %v39, 0
    %365 = vmatprep.subr.mxu0 0.0
    %366 = vmatpush1.msra.mxu0 %v349
    %367 = vmatprep.subr.mxu0 0.0
    %368 = vmatpush1.msra.mxu0 %v350
    %369 = vmatprep.subr.mxu0 0.0
    %370 = vmatpush1.msra.mxu0 %v351
    %371 = vmatprep.subr.mxu0 0.0
    %372 = vmatpush1.msra.mxu0 %v352
    %373 = vmatprep.subr.mxu0 0.0
    %374 = vmatpush1.msra.mxu0 %v353
    %375 = vmatprep.subr.mxu0 0.0
    %376 = vmatpush1.msra.mxu0 %v354
    %377 = vmatprep.subr.mxu0 0.0
    %378 = vmatpush1.msra.mxu0 %v355
    %379 = vmatprep.subr.mxu0 0.0
    %380 = vmatpush1.msra.mxu0 %v356
    %381 = vmatprep.subr.mxu0 0.0
    %382 = vmatpush1.msra.mxu0 0.0
    %383 = vmatprep.subr.mxu0 0.0
    %384 = vmatpush1.msra.mxu0 0.0
    %385 = vmatprep.subr.mxu0 0.0
    %386 = vmatpush1.msra.mxu0 0.0
    %387 = vmatprep.subr.mxu0 0.0
    %388 = vmatpush1.msra.mxu0 0.0
    %389 = vmatprep.subr.mxu0 0.0
    %390 = vmatpush1.msra.mxu0 0.0
    %391 = vmatprep.subr.mxu0 0.0
    %392 = vmatpush1.msra.mxu0 0.0
    %393 = vmatprep.subr.mxu0 0.0
    %394 = vmatpush1.msra.mxu0 0.0
    %395 = vmatprep.subr.mxu0 0.0
    %396 = vmatpush1.msra.mxu0 0.0
    %397 = vmatprep.subr.mxu0 0.0
    %398 = vmatpush1.msra.mxu0 0.0
    %399 = vmatprep.subr.mxu0 0.0
    %400 = vmatpush1.msra.mxu0 0.0
    %401 = vmatprep.subr.mxu0 0.0
    %402 = vmatpush1.msra.mxu0 0.0
    %403 = vmatprep.subr.mxu0 0.0
    %404 = vmatpush1.msra.mxu0 0.0
    %405 = vmatprep.subr.mxu0 0.0
    %406 = vmatpush1.msra.mxu0 0.0
    %407 = vmatprep.subr.mxu0 0.0
    %408 = vmatpush1.msra.mxu0 0.0
    %409 = vmatprep.subr.mxu0 0.0
    %410 = vmatpush1.msra.mxu0 0.0
    %411 = vmatprep.subr.mxu0 0.0
    %412 = vmatpush1.msra.mxu0 0.0
    %413 = vmatprep.subr.mxu0 0.0
    %414 = vmatpush1.msra.mxu0 0.0
    %415 = vmatprep.subr.mxu0 0.0
    %416 = vmatpush1.msra.mxu0 0.0
    %417 = vmatprep.subr.mxu0 0.0
    %418 = vmatpush1.msra.mxu0 0.0
    %419 = vmatprep.subr.mxu0 0.0
    %420 = vmatpush1.msra.mxu0 0.0
    %421 = vmatprep.subr.mxu0 0.0
    %422 = vmatpush1.msra.mxu0 0.0
    %423 = vmatprep.subr.mxu0 0.0
    %424 = vmatpush1.msra.mxu0 0.0
    %425 = vmatprep.subr.mxu0 0.0
    %426 = vmatpush1.msra.mxu0 0.0
    %427 = vmatprep.subr.mxu0 0.0
    %428 = vmatpush1.msra.mxu0 0.0
    %429 = vmatprep.mubr.f32.mxu0 0.0
    %430 = vmatmul.mubr.f32.gmra.mrb[0].mxu0 %v363
    %v431 = vpop.f32.mrb[0].mxu0
    %v432 = vadd.f32 %v360, %v431
    %v433 = vpop.f32.mrb[0].mxu0
    %434 = vdwg.mxu0
    %435 = vst [vmem:[#allocation2] sm:$0x1] %v432
    // Predicated region
    $region10: #{tpu_custom_call.1} parent=1 // pred_check
      _
    $region11: #{tpu_custom_call.1} parent=1 // pred_check_branch
      %437 = sbr.rel (0) target = $region13
    $region12: #{tpu_custom_call.1} parent=1 // pred_region
      %s439 = ssub.s32 16, 16
      %440 = vsyncadd [#allocation3], %s439
      %s442 = sshll.u32 [#allocation2], 4
      %s443 = int_to_ptr.vmem [resolvable:$true] %s442
      %445 = dma.vmem_to_hbm [thread:$0]  %s443, 16, %s2, [#allocation3]
    $region13: #{tpu_custom_call.1} parent=1 // pred_fallthru
      _
    // Predicated region
    $region14: #{tpu_custom_call.1} parent=1 // pred_check
      _
    $region15: #{tpu_custom_call.1} parent=1 // pred_check_branch
      %447 = sbr.rel (0) target = $region17
    $region16: #{tpu_custom_call.1} parent=1 // pred_region
      %448 = dma.done [#allocation3], 16
    $region17: #{tpu_custom_call.1} parent=1 // pred_fallthru
      _
    %449 = vsyncpa [#allocation3], 1

</llo_original>
